<compile_context>
chip_gen: v5e
topology: v5e:2x2
jax: 0.10.0
libtpu: 0.0.40
codegen_flags: <defaults>
</compile_context>

<pallas_src>
import jax
import jax.numpy as jnp
from jax.experimental import pallas as pl
from jax.experimental.pallas import tpu as pltpu

SEQUENCES_LENGTH = 40
HIDDEN_SIZES = [100, 100]
HIDDEN_PAD = 128  # lane-aligned hidden width


def _round_up(x, m):
    return ((x + m - 1) // m) * m


def mlp_kernel(x_ref, w1_ref, b1_ref, w2_ref, b2_ref, w3_ref, b3_ref, o_ref):
    xT = x_ref[...]                                           # (40, bt) bf16

    # fc1 + relu  (MXU bf16, f32 accumulate); bias broadcasts along lanes.
    h1 = jnp.dot(w1_ref[...], xT, preferred_element_type=jnp.float32)  # (128, bt)
    h1 = jnp.maximum(h1 + b1_ref[...], 0.0)

    # fc2 + relu  (bf16 operands, f32 accumulate)
    h2 = jnp.dot(w2_ref[...], h1.astype(jnp.bfloat16),
                 preferred_element_type=jnp.float32)          # (128, bt)
    h2 = jnp.maximum(h2 + b2_ref[...], 0.0)

    # fc3: (1,128) @ (128, bt) -> (1, bt); batch already on the lane axis so the
    # store is lane-dense and no transpose is needed. Scalar bias from SMEM.
    y = jnp.dot(w3_ref[...], h2, preferred_element_type=jnp.float32)   # (1, bt)
    o_ref[...] = (y + b3_ref[0, 0]).astype(o_ref.dtype)


def mlp_forward(x, prep_params, *, block_b=512):
    """x: (B, ...) flattened to (B, SEQUENCES_LENGTH). Returns (B, 1) float32."""
    x2 = x.reshape(x.shape[0], -1)                            # flatten(start_dim=1)
    assert x2.shape[1] == SEQUENCES_LENGTH
    B = x2.shape[0]
    w1t, b1c, w2t, b2c, w3r, b3 = prep_params

    # Batch rides the lane axis -> tile must be a whole number of 128-lane groups.
    bt = max(128, _round_up(min(block_b, B), 128))
    b_pad = _round_up(B, bt)
    num_tiles = b_pad // bt

    # Pad batch, transpose to (features, batch), cast to bf16 (fused in XLA).
    xT = jnp.pad(x2, ((0, b_pad - B), (0, 0))).T.astype(jnp.bfloat16)  # (40, b_pad)

    out = pl.pallas_call(
        mlp_kernel,
        out_shape=jax.ShapeDtypeStruct((1, b_pad), jnp.float32),
        grid=(num_tiles,),
        in_specs=[
            # streamed per-tile activations (batch on lanes)
            pl.BlockSpec((SEQUENCES_LENGTH, bt), lambda i: (0, i)),
            # weights / biases: constant block index -> resident in VMEM
            pl.BlockSpec(w1t.shape, lambda i: (0, 0)),
            pl.BlockSpec(b1c.shape, lambda i: (0, 0)),
            pl.BlockSpec(w2t.shape, lambda i: (0, 0)),
            pl.BlockSpec(b2c.shape, lambda i: (0, 0)),
            pl.BlockSpec(w3r.shape, lambda i: (0, 0)),
            # scalar bias of fc3 lives in SMEM
            pl.BlockSpec(memory_space=pltpu.MemorySpace.SMEM),
        ],
        out_specs=pl.BlockSpec((1, bt), lambda i: (0, i)),
        compiler_params=pltpu.CompilerParams(
            dimension_semantics=("parallel",)),
    )(xT, w1t, b1c, w2t, b2c, w3r, b3)

    return out[0, :B].reshape(B, 1)


def init_params(key):
    """torch.nn.Linear-style init; weights stored (in, out), biases (out,)."""
    k1, k2, k3, k4, k5, k6 = jax.random.split(key, 6)

    def linear_init(kw, kb, fan_in, fan_out):
        bound = 1.0 / (float(fan_in) ** 0.5)
        w = jax.random.uniform(kw, (fan_in, fan_out), jnp.float32, -bound, bound)
        b = jax.random.uniform(kb, (fan_out,), jnp.float32, -bound, bound)
        return w, b

    w1, b1 = linear_init(k1, k2, SEQUENCES_LENGTH, HIDDEN_SIZES[0])
    w2, b2 = linear_init(k3, k4, HIDDEN_SIZES[0], HIDDEN_SIZES[1])
    w3, b3 = linear_init(k5, k6, HIDDEN_SIZES[1], 1)
    return (w1, b1, w2, b2, w3, b3)


def prepare_params(params):
    """Transpose to (out, in), pad hidden dim to 128, cast matmul weights to bf16."""
    w1, b1, w2, b2, w3, b3 = params
    h1n, h2n = HIDDEN_SIZES
    w1t = jnp.zeros((HIDDEN_PAD, SEQUENCES_LENGTH), jnp.float32
                    ).at[:h1n, :].set(w1.T).astype(jnp.bfloat16)       # (128, 40)
    b1c = jnp.zeros((HIDDEN_PAD, 1), jnp.float32).at[:h1n, 0].set(b1)  # (128, 1)
    w2t = jnp.zeros((HIDDEN_PAD, HIDDEN_PAD), jnp.float32
                    ).at[:h2n, :h1n].set(w2.T).astype(jnp.bfloat16)    # (128, 128)
    b2c = jnp.zeros((HIDDEN_PAD, 1), jnp.float32).at[:h2n, 0].set(b2)  # (128, 1)
    w3r = jnp.zeros((1, HIDDEN_PAD), jnp.float32).at[0, :h2n].set(w3[:, 0])  # f32 row
    b3s = jnp.asarray(b3, jnp.float32).reshape(1, 1)
    return (w1t, b1c, w2t, b2c, w3r, b3s)


def mlp_reference_f32(x, params):
    """Pure-f32 reference with the original (unpadded) parameters."""
    w1, b1, w2, b2, w3, b3 = params
    x2 = x.reshape(x.shape[0], -1)
    h = jnp.maximum(x2 @ w1 + b1, 0.0)
    h = jnp.maximum(h @ w2 + b2, 0.0)
    return h @ w3 + b3


def mlp_reference_kernel_precision(x, prep_params):
    """Mirrors the kernel's padded/bf16/transposed math exactly (tight check)."""
    w1t, b1c, w2t, b2c, w3r, b3 = prep_params
    xT = x.reshape(x.shape[0], -1).T.astype(jnp.bfloat16)
    h1 = jnp.maximum(jnp.dot(w1t, xT, preferred_element_type=jnp.float32) + b1c, 0.0)
    h2 = jnp.maximum(jnp.dot(w2t, h1.astype(jnp.bfloat16),
                             preferred_element_type=jnp.float32) + b2c, 0.0)
    y = jnp.dot(w3r, h2, preferred_element_type=jnp.float32) + b3[0, 0]
    return y.T                                                # (B, 1)


if __name__ == "__main__":
    key = jax.random.PRNGKey(0)
    kx, kx2, kp = jax.random.split(key, 3)

    # Small demo: batch=12, input (5, 8) flattened to SEQUENCES_LENGTH=40.
    B = 12
    x = jax.random.normal(kx, (B, 5, 8), jnp.float32)
    params = init_params(kp)
    prep = prepare_params(params)

    # Default tile-size path (single 128-lane tile for B=12).
    y = mlp_forward(x, prep)
    jax.block_until_ready(y)

    # Multi-tile + ragged-batch path: B=300, block_b=128 -> 3 tiles, pad to 384.
    B2 = 300
    xb = jax.random.normal(kx2, (B2, 5, 8), jnp.float32)
    y2 = mlp_forward(xb, prep, block_b=128)
    jax.block_until_ready(y2)

    y_ref_exact = mlp_reference_kernel_precision(x, prep)
    y_ref_f32 = mlp_reference_f32(x, params)
    y2_ref_exact = mlp_reference_kernel_precision(xb, prep)

    assert y.shape == (B, 1)
    assert y2.shape == (B2, 1)
    assert jnp.allclose(y, y_ref_exact, atol=1e-3, rtol=1e-3), \
        f"max err vs bf16 ref: {jnp.max(jnp.abs(y - y_ref_exact))}"
    assert jnp.allclose(y, y_ref_f32, atol=2.5e-2, rtol=0.0), \
        f"max err vs f32 ref: {jnp.max(jnp.abs(y - y_ref_f32))}"
    assert jnp.allclose(y2, y2_ref_exact, atol=1e-3, rtol=1e-3), \
        f"max err vs bf16 ref (multi-tile): {jnp.max(jnp.abs(y2 - y2_ref_exact))}"

    print("KERNEL_OK")
</pallas_src>

<mosaic_0001>
module attributes {stable_mosaic.version = 11 : i64} {
  func.func @mlp_kernel(%arg0: i32, %arg1: memref<40x128xbf16, #tpu.memory_space<vmem>>, %arg2: memref<128x40xbf16, #tpu.memory_space<vmem>>, %arg3: memref<128x1xf32, #tpu.memory_space<vmem>>, %arg4: memref<128x128xbf16, #tpu.memory_space<vmem>>, %arg5: memref<128x1xf32, #tpu.memory_space<vmem>>, %arg6: memref<1x128xf32, #tpu.memory_space<vmem>>, %arg7: memref<1x1xf32, #tpu.memory_space<smem>>, %arg8: memref<1x128xf32, #tpu.memory_space<vmem>>) attributes {dimension_semantics = [#tpu.dimension_semantics<parallel>], iteration_bounds = array<i64: 1>, scalar_prefetch = 0 : i64, scratch_operands = 0 : i64, tpu.core_type = #tpu.core_type<tc>, window_params = [{transform_indices = @transform_0, window_bounds = array<i64: 40, 128>}, {pipeline_mode = #tpu.pipeline_mode<synchronous>, transform_indices = @transform_1, window_bounds = array<i64: 128, 40>}, {pipeline_mode = #tpu.pipeline_mode<synchronous>, transform_indices = @transform_2, window_bounds = array<i64: 128, 1>}, {pipeline_mode = #tpu.pipeline_mode<synchronous>, transform_indices = @transform_3, window_bounds = array<i64: 128, 128>}, {pipeline_mode = #tpu.pipeline_mode<synchronous>, transform_indices = @transform_4, window_bounds = array<i64: 128, 1>}, {pipeline_mode = #tpu.pipeline_mode<synchronous>, transform_indices = @transform_5, window_bounds = array<i64: 1, 128>}, {transform_indices = @transform_6, window_bounds = array<i64: 1, 1>}, {transform_indices = @transform_7, window_bounds = array<i64: 1, 128>}]} {
    %c0 = arith.constant 0 : index
    %c0_0 = arith.constant 0 : index
    %0 = vector.load %arg1[%c0, %c0_0] : memref<40x128xbf16, #tpu.memory_space<vmem>>, vector<40x128xbf16>
    %c0_1 = arith.constant 0 : index
    %c0_2 = arith.constant 0 : index
    %1 = vector.load %arg2[%c0_1, %c0_2] : memref<128x40xbf16, #tpu.memory_space<vmem>>, vector<128x40xbf16>
    %cst = arith.constant dense<0.000000e+00> : vector<128x128xf32>
    %2 = tpu.matmul %1, %0, %cst {dimension_numbers = #tpu.dot_dimension_numbers<[1], [0], [0], [1], [0, 0, 1, 1], [], []>} : vector<128x40xbf16>, vector<40x128xbf16>, vector<128x128xf32> -> vector<128x128xf32>
    %c0_3 = arith.constant 0 : index
    %c0_4 = arith.constant 0 : index
    %3 = vector.load %arg3[%c0_3, %c0_4] : memref<128x1xf32, #tpu.memory_space<vmem>>, vector<128x1xf32>
    %4 = vector.broadcast %3 : vector<128x1xf32> to vector<128x128xf32>
    %5 = arith.addf %2, %4 : vector<128x128xf32>
    %cst_5 = arith.constant 0.000000e+00 : f32
    %6 = vector.broadcast %cst_5 : f32 to vector<128x128xf32>
    %7 = arith.maximumf %5, %6 : vector<128x128xf32>
    %c0_6 = arith.constant 0 : index
    %c0_7 = arith.constant 0 : index
    %8 = vector.load %arg4[%c0_6, %c0_7] : memref<128x128xbf16, #tpu.memory_space<vmem>>, vector<128x128xbf16>
    %9 = arith.truncf %7 : vector<128x128xf32> to vector<128x128xbf16>
    %cst_8 = arith.constant dense<0.000000e+00> : vector<128x128xf32>
    %10 = tpu.matmul %8, %9, %cst_8 {dimension_numbers = #tpu.dot_dimension_numbers<[1], [0], [0], [1], [0, 0, 1, 1], [], []>} : vector<128x128xbf16>, vector<128x128xbf16>, vector<128x128xf32> -> vector<128x128xf32>
    %c0_9 = arith.constant 0 : index
    %c0_10 = arith.constant 0 : index
    %11 = vector.load %arg5[%c0_9, %c0_10] : memref<128x1xf32, #tpu.memory_space<vmem>>, vector<128x1xf32>
    %12 = vector.broadcast %11 : vector<128x1xf32> to vector<128x128xf32>
    %13 = arith.addf %10, %12 : vector<128x128xf32>
    %cst_11 = arith.constant 0.000000e+00 : f32
    %14 = vector.broadcast %cst_11 : f32 to vector<128x128xf32>
    %15 = arith.maximumf %13, %14 : vector<128x128xf32>
    %c0_12 = arith.constant 0 : index
    %c0_13 = arith.constant 0 : index
    %16 = vector.load %arg6[%c0_12, %c0_13] : memref<1x128xf32, #tpu.memory_space<vmem>>, vector<1x128xf32>
    %cst_14 = arith.constant dense<0.000000e+00> : vector<1x128xf32>
    %17 = tpu.matmul %16, %15, %cst_14 {dimension_numbers = #tpu.dot_dimension_numbers<[1], [0], [0], [1], [0, 0, 1, 1], [], []>} : vector<1x128xf32>, vector<128x128xf32>, vector<1x128xf32> -> vector<1x128xf32>
    %c0_15 = arith.constant 0 : index
    %c0_16 = arith.constant 0 : index
    %18 = memref.load %arg7[%c0_15, %c0_16] : memref<1x1xf32, #tpu.memory_space<smem>>
    %19 = vector.broadcast %18 : f32 to vector<1x128xf32>
    %20 = arith.addf %17, %19 : vector<1x128xf32>
    %c0_17 = arith.constant 0 : index
    %c0_18 = arith.constant 0 : index
    %21 = vector.load %arg8[%c0_17, %c0_18] : memref<1x128xf32, #tpu.memory_space<vmem>>, vector<1x128xf32>
    tpu.vector_store %arg8[%c0_17, %c0_18], %20 {strides = array<i32>} : memref<1x128xf32, #tpu.memory_space<vmem>>, vector<1x128xf32>,
    return
  }
  func.func @transform_0(%arg0: i32) -> (i32, i32) {
    %c0_i32 = arith.constant 0 : i32
    %c0_i32_0 = arith.constant 0 : i32
    return %c0_i32, %arg0 : i32, i32
  }
  func.func @transform_1(%arg0: i32) -> (i32, i32) {
    %c0_i32 = arith.constant 0 : i32
    %c0_i32_0 = arith.constant 0 : i32
    %c0_i32_1 = arith.constant 0 : i32
    return %c0_i32, %c0_i32_0 : i32, i32
  }
  func.func @transform_2(%arg0: i32) -> (i32, i32) {
    %c0_i32 = arith.constant 0 : i32
    %c0_i32_0 = arith.constant 0 : i32
    %c0_i32_1 = arith.constant 0 : i32
    return %c0_i32, %c0_i32_0 : i32, i32
  }
  func.func @transform_3(%arg0: i32) -> (i32, i32) {
    %c0_i32 = arith.constant 0 : i32
    %c0_i32_0 = arith.constant 0 : i32
    %c0_i32_1 = arith.constant 0 : i32
    return %c0_i32, %c0_i32_0 : i32, i32
  }
  func.func @transform_4(%arg0: i32) -> (i32, i32) {
    %c0_i32 = arith.constant 0 : i32
    %c0_i32_0 = arith.constant 0 : i32
    %c0_i32_1 = arith.constant 0 : i32
    return %c0_i32, %c0_i32_0 : i32, i32
  }
  func.func @transform_5(%arg0: i32) -> (i32, i32) {
    %c0_i32 = arith.constant 0 : i32
    %c0_i32_0 = arith.constant 0 : i32
    %c0_i32_1 = arith.constant 0 : i32
    return %c0_i32, %c0_i32_0 : i32, i32
  }
  func.func @transform_6(%arg0: i32) -> (i32, i32) {
    %c0_i32 = arith.constant 0 : i32
    %c0_i32_0 = arith.constant 0 : i32
    %c0_i32_1 = arith.constant 0 : i32
    return %c0_i32, %c0_i32_0 : i32, i32
  }
  func.func @transform_7(%arg0: i32) -> (i32, i32) {
    %c0_i32 = arith.constant 0 : i32
    %c0_i32_0 = arith.constant 0 : i32
    return %c0_i32, %arg0 : i32, i32
  }
}

</mosaic_0001>

<llo_original>
// kernel: tpu_custom_call.1
$region0: #{tpu_custom_call.1}
  #allocation0 [shape = 'u32[]', space=smem, size = 0x4, offset = 0x4, fixed_abs, tag = 'smem constant byte address 0x4 - core index']
  #allocation1 [shape = 'u32[72,128]{1,0:T(1,128)}', space=vmem, size = 0x9000, scoped, tag = 'internal scratch']
  #allocation2 [shape = 'f32[1,1]{1,0:T(1,128)S(6)}', space=smem, size = 0x200, scoped, tag = 'scoped memory for tpu_custom_call.1']
  %s0 = inlined_call_operand.vmem [shape: bf16[40,128], index: 0, kind: input, shape index: {}]
  %s1 = inlined_call_operand.vmem [shape: bf16[128,40], index: 1, kind: input, shape index: {}]
  %s2 = inlined_call_operand.vmem [shape: f32[128,1], index: 2, kind: input, shape index: {}]
  %s3 = inlined_call_operand.vmem [shape: bf16[128,128], index: 3, kind: input, shape index: {}]
  %s4 = inlined_call_operand.vmem [shape: f32[128,1], index: 4, kind: input, shape index: {}]
  %s5 = inlined_call_operand.vmem [shape: f32[1,128], index: 5, kind: input, shape index: {}]
  %s6 = inlined_call_operand.<no memory space> [shape: f32[1,1], index: 6, kind: input, shape index: {}]
  %s7 = inlined_call_operand.hbm [shape: f32[1,128], index: 7, kind: output, shape index: {}]
  %s8 = sld [smem:[#allocation0]]
  $region38: #{tpu_custom_call.1} parent=0
    _
  %s10 = ssub.s32 1, %s8
  %s11 = scalar_select 0, %s10, %s8
  %12 = sst [smem:[#allocation2]] %s6
  $region1: #{tpu_custom_call.1} parent=0
    #allocation3 [shape = 'u8[512]{0}', space=vmem, size = 0x400, scoped, tag = 'output window, operand 0, single buffered']
    #allocation4 [shape = 's32[1]{0}', space=sflag, size = 0x4, scoped, tag = 'scoped memory for tpu_custom_call.1']
    %13 = vsyncpa [#allocation4], 0
    // Predicated region
    $region2: #{tpu_custom_call.1} parent=1 // pred_check
      _
    $region3: #{tpu_custom_call.1} parent=1 // pred_check_branch
      %15 = sbr.rel (0) target = $region5
    $region4: #{tpu_custom_call.1} parent=1 // pred_region
      _
    $region5: #{tpu_custom_call.1} parent=1 // pred_fallthru
      _
    // Predicated region
    $region6: #{tpu_custom_call.1} parent=1 // pred_check
      _
    $region7: #{tpu_custom_call.1} parent=1 // pred_check_branch
      %17 = sbr.rel (0) target = $region9
    $region8: #{tpu_custom_call.1} parent=1 // pred_region
      _
    $region9: #{tpu_custom_call.1} parent=1 // pred_fallthru
      _
    // Predicated region
    $region10: #{tpu_custom_call.1} parent=1 // pred_check
      _
    $region11: #{tpu_custom_call.1} parent=1 // pred_check_branch
      %19 = sbr.rel (0) target = $region13
    $region12: #{tpu_custom_call.1} parent=1 // pred_region
      _
    $region13: #{tpu_custom_call.1} parent=1 // pred_fallthru
      _
    // Predicated region
    $region14: #{tpu_custom_call.1} parent=1 // pred_check
      _
    $region15: #{tpu_custom_call.1} parent=1 // pred_check_branch
      %21 = sbr.rel (0) target = $region17
    $region16: #{tpu_custom_call.1} parent=1 // pred_region
      _
    $region17: #{tpu_custom_call.1} parent=1 // pred_fallthru
      _
    // Predicated region
    $region18: #{tpu_custom_call.1} parent=1 // pred_check
      _
    $region19: #{tpu_custom_call.1} parent=1 // pred_check_branch
      %23 = sbr.rel (0) target = $region21
    $region20: #{tpu_custom_call.1} parent=1 // pred_region
      _
    $region21: #{tpu_custom_call.1} parent=1 // pred_fallthru
      _
    // Predicated region
    $region22: #{tpu_custom_call.1} parent=1 // pred_check
      _
    $region23: #{tpu_custom_call.1} parent=1 // pred_check_branch
      %25 = sbr.rel (0) target = $region25
    $region24: #{tpu_custom_call.1} parent=1 // pred_region
      _
    $region25: #{tpu_custom_call.1} parent=1 // pred_fallthru
      _
    // Predicated region
    $region26: #{tpu_custom_call.1} parent=1 // pred_check
      _
    $region27: #{tpu_custom_call.1} parent=1 // pred_check_branch
      %27 = sbr.rel (0) target = $region29
    $region28: #{tpu_custom_call.1} parent=1 // pred_region
      _
    $region29: #{tpu_custom_call.1} parent=1 // pred_fallthru
      _
    %v29 = vld [vmem:[%s0] sm:$0xf]
    %v30 = vld [vmem:[%s0 + $0x4] sm:$0xf]
    %v31 = vld [vmem:[%s0 + $0x8] sm:$0xf]
    %v32 = vld [vmem:[%s0 + $0xc] sm:$0xf]
    %v33 = vld [vmem:[%s0 + $0x10] sm:$0xf]
    %v34 = vld [vmem:[%s1] sm:$0xf]
    %v35 = vld [vmem:[%s1 + $0x4] sm:$0xf]
    %v36 = vld [vmem:[%s1 + $0x8] sm:$0xf]
    %v37 = vld [vmem:[%s1 + $0xc] sm:$0xf]
    %v38 = vld [vmem:[%s1 + $0x10] sm:$0xf]
    %v39 = vld [vmem:[%s1 + $0x14] sm:$0xf]
    %v40 = vld [vmem:[%s1 + $0x18] sm:$0xf]
    %v41 = vld [vmem:[%s1 + $0x1c] sm:$0xf]
    %v42 = vld [vmem:[%s1 + $0x20] sm:$0xf]
    %v43 = vld [vmem:[%s1 + $0x24] sm:$0xf]
    %v44 = vld [vmem:[%s1 + $0x28] sm:$0xf]
    %v45 = vld [vmem:[%s1 + $0x2c] sm:$0xf]
    %v46 = vld [vmem:[%s1 + $0x30] sm:$0xf]
    %v47 = vld [vmem:[%s1 + $0x34] sm:$0xf]
    %v48 = vld [vmem:[%s1 + $0x38] sm:$0xf]
    %v49 = vld [vmem:[%s1 + $0x3c] sm:$0xf]
    %v50 = vld [vmem:[%s2] sm:$0xff]
    %v51 = vld [vmem:[%s2 + $0x8] sm:$0xff]
    %v52 = vld [vmem:[%s2 + $0x10] sm:$0xff]
    %v53 = vld [vmem:[%s2 + $0x18] sm:$0xff]
    %v54 = vld [vmem:[%s2 + $0x20] sm:$0xff]
    %v55 = vld [vmem:[%s2 + $0x28] sm:$0xff]
    %v56 = vld [vmem:[%s2 + $0x30] sm:$0xff]
    %v57 = vld [vmem:[%s2 + $0x38] sm:$0xff]
    %v58 = vld [vmem:[%s2 + $0x40] sm:$0xff]
    %v59 = vld [vmem:[%s2 + $0x48] sm:$0xff]
    %v60 = vld [vmem:[%s2 + $0x50] sm:$0xff]
    %v61 = vld [vmem:[%s2 + $0x58] sm:$0xff]
    %v62 = vld [vmem:[%s2 + $0x60] sm:$0xff]
    %v63 = vld [vmem:[%s2 + $0x68] sm:$0xff]
    %v64 = vld [vmem:[%s2 + $0x70] sm:$0xff]
    %v65 = vld [vmem:[%s2 + $0x78] sm:$0xff]
    %67 = vset.pattern.permute.xlu0 0
    %68 = vperm.xlu0 %67, %v50
    %v69 = vpop.permute.xlu0 %68
    %72 = vset.pattern.permute.xlu0 0
    %73 = vperm.xlu0 %72, %v51
    %v74 = vpop.permute.xlu0 %73
    %77 = vset.pattern.permute.xlu0 0
    %78 = vperm.xlu0 %77, %v52
    %v79 = vpop.permute.xlu0 %78
    %82 = vset.pattern.permute.xlu0 0
    %83 = vperm.xlu0 %82, %v53
    %v84 = vpop.permute.xlu0 %83
    %87 = vset.pattern.permute.xlu0 0
    %88 = vperm.xlu0 %87, %v54
    %v89 = vpop.permute.xlu0 %88
    %92 = vset.pattern.permute.xlu0 0
    %93 = vperm.xlu0 %92, %v55
    %v94 = vpop.permute.xlu0 %93
    %97 = vset.pattern.permute.xlu0 0
    %98 = vperm.xlu0 %97, %v56
    %v99 = vpop.permute.xlu0 %98
    %102 = vset.pattern.permute.xlu0 0
    %103 = vperm.xlu0 %102, %v57
    %v104 = vpop.permute.xlu0 %103
    %107 = vset.pattern.permute.xlu0 0
    %108 = vperm.xlu0 %107, %v58
    %v109 = vpop.permute.xlu0 %108
    %112 = vset.pattern.permute.xlu0 0
    %113 = vperm.xlu0 %112, %v59
    %v114 = vpop.permute.xlu0 %113
    %117 = vset.pattern.permute.xlu0 0
    %118 = vperm.xlu0 %117, %v60
    %v119 = vpop.permute.xlu0 %118
    %122 = vset.pattern.permute.xlu0 0
    %123 = vperm.xlu0 %122, %v61
    %v124 = vpop.permute.xlu0 %123
    %127 = vset.pattern.permute.xlu0 0
    %128 = vperm.xlu0 %127, %v62
    %v129 = vpop.permute.xlu0 %128
    %132 = vset.pattern.permute.xlu0 0
    %133 = vperm.xlu0 %132, %v63
    %v134 = vpop.permute.xlu0 %133
    %137 = vset.pattern.permute.xlu0 0
    %138 = vperm.xlu0 %137, %v64
    %v139 = vpop.permute.xlu0 %138
    %142 = vset.pattern.permute.xlu0 0
    %143 = vperm.xlu0 %142, %v65
    %v144 = vpop.permute.xlu0 %143
    %v162 = vunpack.c.l.b16 %v34
    %v163 = vunpack.c.l.b16 %v35
    %v164 = vunpack.c.l.b16 %v36
    %v165 = vunpack.c.l.b16 %v37
    %v166 = vunpack.c.l.b16 %v38
    %v167 = vunpack.c.l.b16 %v39
    %v168 = vunpack.c.l.b16 %v40
    %v169 = vunpack.c.l.b16 %v41
    %v170 = vunpack.c.l.b16 %v42
    %v171 = vunpack.c.l.b16 %v43
    %v172 = vunpack.c.l.b16 %v44
    %v173 = vunpack.c.l.b16 %v45
    %v174 = vunpack.c.l.b16 %v46
    %v175 = vunpack.c.l.b16 %v47
    %v176 = vunpack.c.l.b16 %v48
    %v177 = vunpack.c.l.b16 %v49
    %v178 = vpack.c.b16 %v163, %v162
    %v179 = vpack.c.b16 %v165, %v164
    %v180 = vpack.c.b16 %v167, %v166
    %v181 = vpack.c.b16 %v169, %v168
    %v182 = vpack.c.b16 %v171, %v170
    %v183 = vpack.c.b16 %v173, %v172
    %v184 = vpack.c.b16 %v175, %v174
    %v185 = vpack.c.b16 %v177, %v176
    %v191 = vunpack.c.l.b16 %v29
    %v192 = vunpack.c.l.b16 %v30
    %v193 = vunpack.c.l.b16 %v31
    %v194 = vunpack.c.l.b16 %v32
    %v195 = vunpack.c.l.b16 %v33
    %v196 = vpack.c.b16 %v192, %v191
    %v197 = vpack.c.b16 %v194, %v193
    %v198 = vpack.c.b16 %v195, %v195
    %vm201 = vcmask 326656
    %v203 = vsel %vm201, %v178, 0
    %v206 = vsel %vm201, %v179, 0
    %v209 = vsel %vm201, %v180, 0
    %v212 = vsel %vm201, %v181, 0
    %v215 = vsel %vm201, %v182, 0
    %v218 = vsel %vm201, %v183, 0
    %v221 = vsel %vm201, %v184, 0
    %v224 = vsel %vm201, %v185, 0
    %vm226 = vcmask 1043456
    %v228 = vsel %vm226, %v198, 0
    %230 = vmatpush.bf16.msra.mxu0 0
    %231 = vmatpush.bf16.msra.mxu0 0
    %232 = vmatpush.bf16.msra.mxu0 0
    %233 = vmatpush.bf16.msra.mxu0 0
    %234 = vmatpush.bf16.msra.mxu0 0
    %235 = vmatpush.bf16.msra.mxu0 %v228
    %236 = vmatpush.bf16.msra.mxu0 %v197
    %237 = vmatpush.bf16.msra.mxu0 %v196
    %238 = vmatmul.bf16.gmra.mxu0 %v203
    %v239 = vpop.f32.mrf.mxu0
    %v240 = vadd.f32 %v69, %v239
    %v241 = vpop.f32.mrf.mxu0
    %v242 = vadd.f32 %v74, %v241
    %243 = vmatmul.bf16.gmra.mxu0 %v206
    %v244 = vpop.f32.mrf.mxu0
    %v245 = vadd.f32 %v79, %v244
    %v246 = vpop.f32.mrf.mxu0
    %v247 = vadd.f32 %v84, %v246
    %248 = vmatmul.bf16.gmra.mxu0 %v209
    %v249 = vpop.f32.mrf.mxu0
    %v250 = vadd.f32 %v89, %v249
    %v251 = vpop.f32.mrf.mxu0
    %v252 = vadd.f32 %v94, %v251
    %253 = vmatmul.bf16.gmra.mxu0 %v212
    %v254 = vpop.f32.mrf.mxu0
    %v255 = vadd.f32 %v99, %v254
    %v256 = vpop.f32.mrf.mxu0
    %v257 = vadd.f32 %v104, %v256
    %258 = vmatmul.bf16.gmra.mxu0 %v215
    %v259 = vpop.f32.mrf.mxu0
    %v260 = vadd.f32 %v109, %v259
    %v261 = vpop.f32.mrf.mxu0
    %v262 = vadd.f32 %v114, %v261
    %263 = vmatmul.bf16.gmra.mxu0 %v218
    %v264 = vpop.f32.mrf.mxu0
    %v265 = vadd.f32 %v119, %v264
    %v266 = vpop.f32.mrf.mxu0
    %v267 = vadd.f32 %v124, %v266
    %268 = vmatmul.bf16.gmra.mxu0 %v221
    %v269 = vpop.f32.mrf.mxu0
    %v270 = vadd.f32 %v129, %v269
    %v271 = vpop.f32.mrf.mxu0
    %v272 = vadd.f32 %v134, %v271
    %273 = vmatmul.bf16.gmra.mxu0 %v224
    %v274 = vpop.f32.mrf.mxu0
    %v275 = vadd.f32 %v139, %v274
    %v276 = vpop.f32.mrf.mxu0
    %v277 = vadd.f32 %v144, %v276
    %278 = vdwg.mxu0
    %v279 = vmax.f32 %v240, 0.0
    %v280 = vmax.f32 %v242, 0.0
    %v281 = vmax.f32 %v245, 0.0
    %v282 = vmax.f32 %v247, 0.0
    %v283 = vmax.f32 %v250, 0.0
    %v284 = vmax.f32 %v252, 0.0
    %v285 = vmax.f32 %v255, 0.0
    %v286 = vmax.f32 %v257, 0.0
    %v287 = vmax.f32 %v260, 0.0
    %v288 = vmax.f32 %v262, 0.0
    %v289 = vmax.f32 %v265, 0.0
    %v290 = vmax.f32 %v267, 0.0
    %v291 = vmax.f32 %v270, 0.0
    %v292 = vmax.f32 %v272, 0.0
    %v293 = vmax.f32 %v275, 0.0
    %v294 = vmax.f32 %v277, 0.0
    %v295 = vld [vmem:[%s3] sm:$0xf]
    %v296 = vld [vmem:[%s3 + $0x4] sm:$0xf]
    %v297 = vld [vmem:[%s3 + $0x8] sm:$0xf]
    %v298 = vld [vmem:[%s3 + $0xc] sm:$0xf]
    %v299 = vld [vmem:[%s3 + $0x10] sm:$0xf]
    %v300 = vld [vmem:[%s3 + $0x14] sm:$0xf]
    %v301 = vld [vmem:[%s3 + $0x18] sm:$0xf]
    %v302 = vld [vmem:[%s3 + $0x1c] sm:$0xf]
    %v303 = vld [vmem:[%s3 + $0x20] sm:$0xf]
    %v304 = vld [vmem:[%s3 + $0x24] sm:$0xf]
    %v305 = vld [vmem:[%s3 + $0x28] sm:$0xf]
    %v306 = vld [vmem:[%s3 + $0x2c] sm:$0xf]
    %v307 = vld [vmem:[%s3 + $0x30] sm:$0xf]
    %v308 = vld [vmem:[%s3 + $0x34] sm:$0xf]
    %v309 = vld [vmem:[%s3 + $0x38] sm:$0xf]
    %v310 = vld [vmem:[%s3 + $0x3c] sm:$0xf]
    %v311 = vpack.c.bf16 %v280, %v279
    %v312 = vpack.c.bf16 %v282, %v281
    %v313 = vpack.c.bf16 %v284, %v283
    %v314 = vpack.c.bf16 %v286, %v285
    %v315 = vpack.c.bf16 %v288, %v287
    %v316 = vpack.c.bf16 %v290, %v289
    %v317 = vpack.c.bf16 %v292, %v291
    %v318 = vpack.c.bf16 %v294, %v293
    %v319 = vld [vmem:[%s4] sm:$0xff]
    %v320 = vld [vmem:[%s4 + $0x8] sm:$0xff]
    %v321 = vld [vmem:[%s4 + $0x10] sm:$0xff]
    %v322 = vld [vmem:[%s4 + $0x18] sm:$0xff]
    %v323 = vld [vmem:[%s4 + $0x20] sm:$0xff]
    %v324 = vld [vmem:[%s4 + $0x28] sm:$0xff]
    %v325 = vld [vmem:[%s4 + $0x30] sm:$0xff]
    %v326 = vld [vmem:[%s4 + $0x38] sm:$0xff]
    %v327 = vld [vmem:[%s4 + $0x40] sm:$0xff]
    %v328 = vld [vmem:[%s4 + $0x48] sm:$0xff]
    %v329 = vld [vmem:[%s4 + $0x50] sm:$0xff]
    %v330 = vld [vmem:[%s4 + $0x58] sm:$0xff]
    %v331 = vld [vmem:[%s4 + $0x60] sm:$0xff]
    %v332 = vld [vmem:[%s4 + $0x68] sm:$0xff]
    %v333 = vld [vmem:[%s4 + $0x70] sm:$0xff]
    %v334 = vld [vmem:[%s4 + $0x78] sm:$0xff]
    %336 = vset.pattern.permute.xlu0 0
    %337 = vperm.xlu0 %336, %v319
    %v338 = vpop.permute.xlu0 %337
    %341 = vset.pattern.permute.xlu0 0
    %342 = vperm.xlu0 %341, %v320
    %v343 = vpop.permute.xlu0 %342
    %346 = vset.pattern.permute.xlu0 0
    %347 = vperm.xlu0 %346, %v321
    %v348 = vpop.permute.xlu0 %347
    %351 = vset.pattern.permute.xlu0 0
    %352 = vperm.xlu0 %351, %v322
    %v353 = vpop.permute.xlu0 %352
    %356 = vset.pattern.permute.xlu0 0
    %357 = vperm.xlu0 %356, %v323
    %v358 = vpop.permute.xlu0 %357
    %361 = vset.pattern.permute.xlu0 0
    %362 = vperm.xlu0 %361, %v324
    %v363 = vpop.permute.xlu0 %362
    %366 = vset.pattern.permute.xlu0 0
    %367 = vperm.xlu0 %366, %v325
    %v368 = vpop.permute.xlu0 %367
    %371 = vset.pattern.permute.xlu0 0
    %372 = vperm.xlu0 %371, %v326
    %v373 = vpop.permute.xlu0 %372
    %376 = vset.pattern.permute.xlu0 0
    %377 = vperm.xlu0 %376, %v327
    %v378 = vpop.permute.xlu0 %377
    %381 = vset.pattern.permute.xlu0 0
    %382 = vperm.xlu0 %381, %v328
    %v383 = vpop.permute.xlu0 %382
    %386 = vset.pattern.permute.xlu0 0
    %387 = vperm.xlu0 %386, %v329
    %v388 = vpop.permute.xlu0 %387
    %391 = vset.pattern.permute.xlu0 0
    %392 = vperm.xlu0 %391, %v330
    %v393 = vpop.permute.xlu0 %392
    %396 = vset.pattern.permute.xlu0 0
    %397 = vperm.xlu0 %396, %v331
    %v398 = vpop.permute.xlu0 %397
    %401 = vset.pattern.permute.xlu0 0
    %402 = vperm.xlu0 %401, %v332
    %v403 = vpop.permute.xlu0 %402
    %406 = vset.pattern.permute.xlu0 0
    %407 = vperm.xlu0 %406, %v333
    %v408 = vpop.permute.xlu0 %407
    %411 = vset.pattern.permute.xlu0 0
    %412 = vperm.xlu0 %411, %v334
    %v413 = vpop.permute.xlu0 %412
    %v431 = vunpack.c.l.b16 %v295
    %v432 = vunpack.c.l.b16 %v296
    %v433 = vunpack.c.l.b16 %v297
    %v434 = vunpack.c.l.b16 %v298
    %v435 = vunpack.c.l.b16 %v299
    %v436 = vunpack.c.l.b16 %v300
    %v437 = vunpack.c.l.b16 %v301
    %v438 = vunpack.c.l.b16 %v302
    %v439 = vunpack.c.l.b16 %v303
    %v440 = vunpack.c.l.b16 %v304
    %v441 = vunpack.c.l.b16 %v305
    %v442 = vunpack.c.l.b16 %v306
    %v443 = vunpack.c.l.b16 %v307
    %v444 = vunpack.c.l.b16 %v308
    %v445 = vunpack.c.l.b16 %v309
    %v446 = vunpack.c.l.b16 %v310
    %v447 = vpack.c.b16 %v432, %v431
    %v448 = vpack.c.b16 %v434, %v433
    %v449 = vpack.c.b16 %v436, %v435
    %v450 = vpack.c.b16 %v438, %v437
    %v451 = vpack.c.b16 %v440, %v439
    %v452 = vpack.c.b16 %v442, %v441
    %v453 = vpack.c.b16 %v444, %v443
    %v454 = vpack.c.b16 %v446, %v445
    %463 = vmatpush.bf16.msra.mxu0 %v318
    %464 = vmatpush.bf16.msra.mxu0 %v317
    %465 = vmatpush.bf16.msra.mxu0 %v316
    %466 = vmatpush.bf16.msra.mxu0 %v315
    %467 = vmatpush.bf16.msra.mxu0 %v314
    %468 = vmatpush.bf16.msra.mxu0 %v313
    %469 = vmatpush.bf16.msra.mxu0 %v312
    %470 = vmatpush.bf16.msra.mxu0 %v311
    %471 = vmatmul.bf16.gmra.mxu0 %v447
    %v472 = vpop.f32.mrf.mxu0
    %v473 = vadd.f32 %v338, %v472
    %v474 = vpop.f32.mrf.mxu0
    %v475 = vadd.f32 %v343, %v474
    %476 = vmatmul.bf16.gmra.mxu0 %v448
    %v477 = vpop.f32.mrf.mxu0
    %v478 = vadd.f32 %v348, %v477
    %v479 = vpop.f32.mrf.mxu0
    %v480 = vadd.f32 %v353, %v479
    %481 = vmatmul.bf16.gmra.mxu0 %v449
    %v482 = vpop.f32.mrf.mxu0
    %v483 = vadd.f32 %v358, %v482
    %v484 = vpop.f32.mrf.mxu0
    %v485 = vadd.f32 %v363, %v484
    %486 = vmatmul.bf16.gmra.mxu0 %v450
    %v487 = vpop.f32.mrf.mxu0
    %v488 = vadd.f32 %v368, %v487
    %v489 = vpop.f32.mrf.mxu0
    %v490 = vadd.f32 %v373, %v489
    %491 = vmatmul.bf16.gmra.mxu0 %v451
    %v492 = vpop.f32.mrf.mxu0
    %v493 = vadd.f32 %v378, %v492
    %v494 = vpop.f32.mrf.mxu0
    %v495 = vadd.f32 %v383, %v494
    %496 = vmatmul.bf16.gmra.mxu0 %v452
    %v497 = vpop.f32.mrf.mxu0
    %v498 = vadd.f32 %v388, %v497
    %v499 = vpop.f32.mrf.mxu0
    %v500 = vadd.f32 %v393, %v499
    %501 = vmatmul.bf16.gmra.mxu0 %v453
    %v502 = vpop.f32.mrf.mxu0
    %v503 = vadd.f32 %v398, %v502
    %v504 = vpop.f32.mrf.mxu0
    %v505 = vadd.f32 %v403, %v504
    %506 = vmatmul.bf16.gmra.mxu0 %v454
    %v507 = vpop.f32.mrf.mxu0
    %v508 = vadd.f32 %v408, %v507
    %v509 = vpop.f32.mrf.mxu0
    %v510 = vadd.f32 %v413, %v509
    %511 = vdwg.mxu0
    %v512 = vmax.f32 %v473, 0.0
    %v513 = vmax.f32 %v475, 0.0
    %v514 = vmax.f32 %v478, 0.0
    %v515 = vmax.f32 %v480, 0.0
    %v516 = vmax.f32 %v483, 0.0
    %v517 = vmax.f32 %v485, 0.0
    %v518 = vmax.f32 %v488, 0.0
    %v519 = vmax.f32 %v490, 0.0
    %v520 = vmax.f32 %v493, 0.0
    %v521 = vmax.f32 %v495, 0.0
    %v522 = vmax.f32 %v498, 0.0
    %v523 = vmax.f32 %v500, 0.0
    %v524 = vmax.f32 %v503, 0.0
    %v525 = vmax.f32 %v505, 0.0
    %v526 = vmax.f32 %v508, 0.0
    %v527 = vmax.f32 %v510, 0.0
    %v528 = vld [vmem:[%s5] sm:$0x1]
    %s529 = sld [smem:[#allocation2]]
    %v530 = vstv %s529
    %531 = vmatpush.msra.mxu0 %v527
    %532 = vmatpush.msra.mxu0 %v526
    %533 = vmatpush.msra.mxu0 %v525
    %534 = vmatpush.msra.mxu0 %v524
    %535 = vmatpush.msra.mxu0 %v523
    %536 = vmatpush.msra.mxu0 %v522
    %537 = vmatpush.msra.mxu0 %v521
    %538 = vmatpush.msra.mxu0 %v520
    %539 = vmatpush.msra.mxu0 %v519
    %540 = vmatpush.msra.mxu0 %v518
    %541 = vmatpush.msra.mxu0 %v517
    %542 = vmatpush.msra.mxu0 %v516
    %543 = vmatpush.msra.mxu0 %v515
    %544 = vmatpush.msra.mxu0 %v514
    %545 = vmatpush.msra.mxu0 %v513
    %546 = vmatpush.msra.mxu0 %v512
    %547 = vmatmul.f32.gmra.mxu0 %v528
    %v548 = vpop.f32.mrf.mxu0
    %v549 = vadd.f32 %v530, %v548
    %550 = vdwg.mxu0
    %551 = vst [vmem:[#allocation3] sm:$0x1] %v549
    // Predicated region
    $region30: #{tpu_custom_call.1} parent=1 // pred_check
      _
    $region31: #{tpu_custom_call.1} parent=1 // pred_check_branch
      %553 = sbr.rel (0) target = $region33
    $region32: #{tpu_custom_call.1} parent=1 // pred_region
      %555 = vsyncadd [#allocation4], 0
      %s557 = sshll.u32 [#allocation3], 4
      %s558 = int_to_ptr.vmem [resolvable:$true] %s557
      %s559 = sshll.u32 %s7, 4
      %s560 = int_to_ptr.hbm [resolvable:$true] %s559
      %562 = dma.vmem_to_hbm [thread:$0]  %s558, 16, %s560, [#allocation4]
    $region33: #{tpu_custom_call.1} parent=1 // pred_fallthru
      _
    // Predicated region
    $region34: #{tpu_custom_call.1} parent=1 // pred_check
      _
    $region35: #{tpu_custom_call.1} parent=1 // pred_check_branch
      %564 = sbr.rel (0) target = $region37
    $region36: #{tpu_custom_call.1} parent=1 // pred_region
      %566 = dma.done [#allocation4], 16
    $region37: #{tpu_custom_call.1} parent=1 // pred_fallthru
      _
    %567 = vsyncpa [#allocation4], 1

</llo_original>
